<compile_context>
chip_gen: v7x
topology: tpu7x:2x2x1
jax: 0.10.0
libtpu: 0.0.40
codegen_flags: <defaults>
</compile_context>

<pallas_src>
import jax
import jax.numpy as jnp
from jax.experimental import pallas as pl
from jax.experimental.pallas import tpu as pltpu

_EPS = 1e-5
_NEG_SLOPE = 0.01          # nn.LeakyReLU() default
_LANE = 128
_MIB = 1024 * 1024


def _round_up(n, m):
    return (n + m - 1) // m * m


def _vmem_capacity_bytes():
    try:
        return int(pltpu.get_tpu_info().vmem_capacity_bytes)
    except Exception:
        return 64 * _MIB   # conservative fallback (v7x per-TC VMEM)


# ---------- Stage 1: fc_hidden -> LeakyReLU -> BatchNorm1d (batch stats) ----------
def _hidden_bn_kernel(x_ref, w1_ref, b1_ref, gamma_ref, beta_ref, h_ref):
    h = jnp.dot(x_ref[...], w1_ref[...],
                preferred_element_type=jnp.float32) + b1_ref[...]
    # LeakyReLU
    h = jnp.where(h >= 0, h, _NEG_SLOPE * h)
    # BatchNorm1d, training-mode semantics: biased batch stats over axis 0,
    # f32 math.  Fold normalize + affine into one FMA per element.
    mean = jnp.mean(h, axis=0, keepdims=True)
    var = jnp.mean((h - mean) * (h - mean), axis=0, keepdims=True)
    scale = gamma_ref[...] * jax.lax.rsqrt(var + _EPS)
    shift = beta_ref[...] - mean * scale
    h_ref[...] = (h * scale + shift).astype(h_ref.dtype)


# ---------- Stage 2: logits tile = h @ W2_tile + b2_tile ----------
def _classifier_kernel(h_ref, w2_ref, b2_ref, out_ref):
    out_ref[...] = (jnp.dot(h_ref[...], w2_ref[...],
                            preferred_element_type=jnp.float32)
                    + b2_ref[...]).astype(out_ref.dtype)


def xvec_head(x, w1, b1, gamma, beta, w2, b2, *,
              gemm_dtype=None, tile_c=None, w2_buffers=None):
    """Fused XVecHead forward.

    x: (B, F); w1: (F, H) [pre-transposed vs PyTorch]; b1/gamma/beta: (H,);
    w2: (H, C) [pre-transposed]; b2: (C,).
    gemm_dtype: None (f32 GEMM) or jnp.bfloat16 -> GEMM operands (x, w1, w2 and
    the cached post-BN hidden) are stored in HBM in bf16; accumulation and BN
    math stay f32.
    """
    B, F = x.shape
    H = w1.shape[1]
    C = w2.shape[1]

    F_pad = _round_up(F, _LANE)
    H_pad = _round_up(H, _LANE)

    f32 = jnp.float32
    gd = f32 if gemm_dtype is None else gemm_dtype
    gd_bytes = jnp.dtype(gd).itemsize

    def pad2(a, rows, cols, dtype):
        a = a.astype(dtype)
        return jnp.pad(a, ((0, rows - a.shape[0]), (0, cols - a.shape[1])))

    # Zero padding is exact: padded F / H / C columns produce zero
    # contributions and zero activations (gamma/beta/b pads are zero), so the
    # real outputs are unchanged; padded logit columns are sliced off at the end.
    x_p = pad2(x, B, F_pad, gd)
    w1_p = pad2(w1, F_pad, H_pad, gd)
    b1_p = pad2(b1.reshape(1, H), 1, H_pad, f32)
    gamma_p = pad2(gamma.reshape(1, H), 1, H_pad, f32)
    beta_p = pad2(beta.reshape(1, H), 1, H_pad, f32)

    vmem_cap = _vmem_capacity_bytes()
    vmem_limit = int(vmem_cap * 0.9)

    # --- Stage 1: one small un-gridded call; hidden stored in GEMM dtype ---
    h_p = pl.pallas_call(
        _hidden_bn_kernel,
        out_shape=jax.ShapeDtypeStruct((B, H_pad), gd),
        compiler_params=pltpu.CompilerParams(vmem_limit_bytes=vmem_limit),
    )(x_p, w1_p, b1_p, gamma_p, beta_p)
    # TODO(synk): tile stage 1 over H (and B) for very large F/H/B where the
    # full w1 block would not fit VMEM.

    # --- Stage 2 tile sizing: generation-aware VMEM budget ---
    n_buf = 2 if w2_buffers is None else int(w2_buffers)
    if tile_c is None:
        # Resident h block counted as double-buffered (constant index_map still
        # allocates the pipeline buffers) + compiler-scratch headroom.
        resident = 2 * B * H_pad * gd_bytes + 2 * _MIB
        # Per class column: w2 tile in its *actual* HBM dtype, f32 b2, f32 out,
        # each multiplied by the pipeline depth.
        per_col = n_buf * (H_pad * gd_bytes + 4 + B * 4)
        budget = max(vmem_limit - resident, per_col * _LANE)
        cap = 8192 if vmem_cap > 96 * _MIB else 4096   # v5e/v6e vs v7x
        tile_c = min(cap, budget // per_col)
        tile_c = max(_LANE, (tile_c // _LANE) * _LANE)
    tile_c = max(_LANE, min(_round_up(tile_c, _LANE), _round_up(C, _LANE)))

    # Pad C UP to a multiple of tile_c (instead of shrinking tile_c to a
    # divisor of C_pad) so awkward class counts keep large lane-dense tiles.
    C_grid = _round_up(C, tile_c)
    w2_p = pad2(w2, H_pad, C_grid, gd)
    b2_p = pad2(b2.reshape(1, C), 1, C_grid, f32)

    grid = (C_grid // tile_c,)
    w2_kw = {} if w2_buffers is None else {"pipeline_mode": pl.Buffered(n_buf)}

    out = pl.pallas_call(
        _classifier_kernel,
        out_shape=jax.ShapeDtypeStruct((B, C_grid), jnp.float32),
        grid_spec=pltpu.PrefetchScalarGridSpec(
            num_scalar_prefetch=0,
            grid=grid,
            in_specs=[
                pl.BlockSpec((B, H_pad), lambda j: (0, 0)),             # h (resident)
                pl.BlockSpec((H_pad, tile_c), lambda j: (0, j), **w2_kw),  # w2 tile
                pl.BlockSpec((1, tile_c), lambda j: (0, j)),             # b2 tile
            ],
            out_specs=pl.BlockSpec((B, tile_c), lambda j: (0, j)),
        ),
        compiler_params=pltpu.CompilerParams(
            # C tiles are fully independent now (no shared scratch), so the C
            # sweep can shard across both v7x TensorCores.
            dimension_semantics=("parallel",),
            vmem_limit_bytes=vmem_limit,
        ),
    )(h_p, w2_p, b2_p)

    # TODO(synk): fp8 (e4m3) w2 with per-column scale folded into the epilogue
    # for a further ~2x HBM reduction on v7x.
    return out[:, :C]


def init_params(key, num_features, num_classes, hidden_features=None):
    hidden_features = num_features if not hidden_features else hidden_features
    k1, k2, k3, k4 = jax.random.split(key, 4)

    bound1 = 1.0 / (num_features ** 0.5)
    w1 = jax.random.uniform(k1, (num_features, hidden_features),
                            jnp.float32, -bound1, bound1)
    b1 = jax.random.uniform(k2, (hidden_features,), jnp.float32, -bound1, bound1)

    gamma = jnp.ones((hidden_features,), jnp.float32)   # BatchNorm1d affine init
    beta = jnp.zeros((hidden_features,), jnp.float32)

    bound2 = 1.0 / (hidden_features ** 0.5)
    w2 = jax.random.uniform(k3, (hidden_features, num_classes),
                            jnp.float32, -bound2, bound2)
    b2 = jax.random.uniform(k4, (num_classes,), jnp.float32, -bound2, bound2)

    return w1, b1, gamma, beta, w2, b2


if __name__ == "__main__":
    key = jax.random.PRNGKey(0)
    kx, kp = jax.random.split(key)

    B, num_features, hidden_features, num_classes = 8, 32, 32, 16
    x = jax.random.normal(kx, (B, num_features), jnp.float32)
    params = init_params(kp, num_features, num_classes, hidden_features)

    # Pure-JAX reference (train-mode BatchNorm, biased batch stats).
    w1, b1, gamma, beta, w2, b2 = params
    h = x @ w1 + b1
    h = jnp.where(h >= 0, h, 0.01 * h)
    mean = jnp.mean(h, axis=0, keepdims=True)
    var = jnp.mean((h - mean) ** 2, axis=0, keepdims=True)
    h = (h - mean) / jnp.sqrt(var + 1e-5) * gamma + beta
    ref = h @ w2 + b2

    # f32 path: exact-ish, tight check.
    out = xvec_head(x, *params)
    jax.block_until_ready(out)
    assert out.shape == (B, num_classes)
    assert jnp.allclose(out, ref, atol=1e-4, rtol=1e-4)

    # bf16 GEMM path (the HBM-bandwidth optimization): looser tolerance.
    out_bf16 = xvec_head(x, *params, gemm_dtype=jnp.bfloat16)
    jax.block_until_ready(out_bf16)
    assert out_bf16.shape == (B, num_classes)
    assert jnp.allclose(out_bf16, ref, atol=1e-1, rtol=1e-1)

    print("KERNEL_OK")
</pallas_src>

<mosaic_0001>
module attributes {stable_mosaic.version = 11 : i64} {
  func.func @_hidden_bn_kernel(%arg0: memref<8x128xf32, #tpu.memory_space<vmem>>, %arg1: memref<128x128xf32, #tpu.memory_space<vmem>>, %arg2: memref<1x128xf32, #tpu.memory_space<vmem>>, %arg3: memref<1x128xf32, #tpu.memory_space<vmem>>, %arg4: memref<1x128xf32, #tpu.memory_space<vmem>>, %arg5: memref<8x128xf32, #tpu.memory_space<vmem>>) attributes {dimension_semantics = [], scalar_prefetch = 0 : i64, scratch_operands = 0 : i64, tpu.core_type = #tpu.core_type<tc>} {
    %c0 = arith.constant 0 : index
    %c0_0 = arith.constant 0 : index
    %0 = vector.load %arg0[%c0, %c0_0] : memref<8x128xf32, #tpu.memory_space<vmem>>, vector<8x128xf32>
    %c0_1 = arith.constant 0 : index
    %c0_2 = arith.constant 0 : index
    %1 = vector.load %arg1[%c0_1, %c0_2] : memref<128x128xf32, #tpu.memory_space<vmem>>, vector<128x128xf32>
    %cst = arith.constant dense<0.000000e+00> : vector<8x128xf32>
    %2 = tpu.matmul %0, %1, %cst {dimension_numbers = #tpu.dot_dimension_numbers<[1], [0], [0], [1], [0, 0, 1, 1], [], []>} : vector<8x128xf32>, vector<128x128xf32>, vector<8x128xf32> -> vector<8x128xf32>
    %c0_3 = arith.constant 0 : index
    %c0_4 = arith.constant 0 : index
    %3 = vector.load %arg2[%c0_3, %c0_4] : memref<1x128xf32, #tpu.memory_space<vmem>>, vector<1x128xf32>
    %4 = vector.broadcast %3 : vector<1x128xf32> to vector<8x128xf32>
    %5 = arith.addf %2, %4 : vector<8x128xf32>
    %cst_5 = arith.constant 0.000000e+00 : f32
    %6 = vector.broadcast %cst_5 : f32 to vector<8x128xf32>
    %7 = arith.cmpf oge, %5, %6 : vector<8x128xf32>
    %cst_6 = arith.constant 0.00999999977 : f32
    %8 = vector.broadcast %cst_6 : f32 to vector<8x128xf32>
    %9 = arith.mulf %8, %5 : vector<8x128xf32>
    %10 = arith.select %7, %5, %9 : vector<8x128xi1>, vector<8x128xf32>
    %cst_7 = arith.constant dense<0.000000e+00> : vector<128xf32>
    %11 = vector.multi_reduction <add>, %10, %cst_7 [0] : vector<8x128xf32> to vector<128xf32>
    %12 = vector.shape_cast %11 : vector<128xf32> to vector<1x128xf32>
    %cst_8 = arith.constant 8.000000e+00 : f32
    %13 = vector.broadcast %cst_8 : f32 to vector<1x128xf32>
    %14 = arith.divf %12, %13 : vector<1x128xf32>
    %15 = vector.broadcast %14 : vector<1x128xf32> to vector<8x128xf32>
    %16 = arith.subf %10, %15 : vector<8x128xf32>
    %17 = vector.broadcast %14 : vector<1x128xf32> to vector<8x128xf32>
    %18 = arith.subf %10, %17 : vector<8x128xf32>
    %19 = arith.mulf %16, %18 : vector<8x128xf32>
    %cst_9 = arith.constant dense<0.000000e+00> : vector<128xf32>
    %20 = vector.multi_reduction <add>, %19, %cst_9 [0] : vector<8x128xf32> to vector<128xf32>
    %21 = vector.shape_cast %20 : vector<128xf32> to vector<1x128xf32>
    %cst_10 = arith.constant 8.000000e+00 : f32
    %22 = vector.broadcast %cst_10 : f32 to vector<1x128xf32>
    %23 = arith.divf %21, %22 : vector<1x128xf32>
    %c0_11 = arith.constant 0 : index
    %c0_12 = arith.constant 0 : index
    %24 = vector.load %arg3[%c0_11, %c0_12] : memref<1x128xf32, #tpu.memory_space<vmem>>, vector<1x128xf32>
    %cst_13 = arith.constant 9.99999974E-6 : f32
    %25 = vector.broadcast %cst_13 : f32 to vector<1x128xf32>
    %26 = arith.addf %23, %25 : vector<1x128xf32>
    %27 = math.rsqrt %26 : vector<1x128xf32>
    %28 = arith.mulf %24, %27 : vector<1x128xf32>
    %c0_14 = arith.constant 0 : index
    %c0_15 = arith.constant 0 : index
    %29 = vector.load %arg4[%c0_14, %c0_15] : memref<1x128xf32, #tpu.memory_space<vmem>>, vector<1x128xf32>
    %30 = arith.mulf %14, %28 : vector<1x128xf32>
    %31 = arith.subf %29, %30 : vector<1x128xf32>
    %32 = vector.broadcast %28 : vector<1x128xf32> to vector<8x128xf32>
    %33 = arith.mulf %10, %32 : vector<8x128xf32>
    %34 = vector.broadcast %31 : vector<1x128xf32> to vector<8x128xf32>
    %35 = arith.addf %33, %34 : vector<8x128xf32>
    %c0_16 = arith.constant 0 : index
    %c0_17 = arith.constant 0 : index
    %36 = vector.load %arg5[%c0_16, %c0_17] : memref<8x128xf32, #tpu.memory_space<vmem>>, vector<8x128xf32>
    tpu.vector_store %arg5[%c0_16, %c0_17], %35 {strides = array<i32>} : memref<8x128xf32, #tpu.memory_space<vmem>>, vector<8x128xf32>,
    return
  }
}

</mosaic_0001>

<llo_original>
// kernel: tpu_custom_call.1
$region0: #{tpu_custom_call.1}
  #allocation0 [shape = 'u32[]', space=smem, size = 0x4, offset = 0x4, fixed_abs, tag = 'smem constant byte address 0x4 - core index']
  #allocation1 [shape = 'u32[144,128]{1,0:T(1,128)}', space=vmem, size = 0x12000, scoped, tag = 'internal scratch']
  %s0 = inlined_call_operand.hbm [shape: f32[8,128], index: 0, kind: input, shape index: {}]
  %s1 = inlined_call_operand.hbm [shape: f32[128,128], index: 1, kind: input, shape index: {}]
  %s2 = inlined_call_operand.vmem [shape: f32[1,128], index: 2, kind: input, shape index: {}]
  %s3 = inlined_call_operand.vmem [shape: f32[1,128], index: 3, kind: input, shape index: {}]
  %s4 = inlined_call_operand.vmem [shape: f32[1,128], index: 4, kind: input, shape index: {}]
  %s5 = inlined_call_operand.hbm [shape: f32[8,128], index: 5, kind: output, shape index: {}]
  %s6 = sld [smem:[#allocation0]]
  $region38: #{tpu_custom_call.1} parent=0
    _
  %s8 = ssub.s32 1, %s6
  %s9 = scalar_select 0, %s8, %s6
  $region1: #{tpu_custom_call.1} parent=0
    #allocation2 [shape = 'u8[4096]{0}', space=vmem, size = 0x1000, scoped, tag = 'input window, operand 0, single buffered']
    #allocation3 [shape = 's32[1]{0}', space=sflag, size = 0x4, scoped, tag = 'scoped memory for tpu_custom_call.1']
    #allocation4 [shape = 's32[1]{0}', space=sflag, size = 0x4, scoped, tag = 'scoped memory for tpu_custom_call.1']
    #allocation5 [shape = 'u8[65536]{0}', space=vmem, size = 0x10000, scoped, tag = 'input window, operand 1, single buffered']
    #allocation6 [shape = 's32[1]{0}', space=sflag, size = 0x4, scoped, tag = 'scoped memory for tpu_custom_call.1']
    #allocation7 [shape = 'u8[4096]{0}', space=vmem, size = 0x1000, scoped, tag = 'output window, operand 0, single buffered']
    %10 = vsyncpa [#allocation3], 0
    %11 = vsyncpa [#allocation6], 0
    %12 = vsyncpa [#allocation4], 0
    // Predicated region
    $region2: #{tpu_custom_call.1} parent=1 // pred_check
      _
    $region3: #{tpu_custom_call.1} parent=1 // pred_check_branch
      %14 = sbr.rel (0) target = $region5
    $region4: #{tpu_custom_call.1} parent=1 // pred_region
      %s16 = ssub.s32 128, 128
      %17 = vsyncadd [#allocation3], %s16
      %s19 = sshll.u32 [#allocation2], 4
      %s20 = int_to_ptr.vmem [resolvable:$true] %s19
      %22 = dma.hbm_to_vmem [thread:$0]  %s0, 128, %s20, [#allocation3]
    $region5: #{tpu_custom_call.1} parent=1 // pred_fallthru
      _
    // Predicated region
    $region6: #{tpu_custom_call.1} parent=1 // pred_check
      _
    $region7: #{tpu_custom_call.1} parent=1 // pred_check_branch
      %24 = sbr.rel (0) target = $region9
    $region8: #{tpu_custom_call.1} parent=1 // pred_region
      %s26 = ssub.s32 2048, 2048
      %27 = vsyncadd [#allocation6], %s26
      %s28 = sshll.u32 [#allocation5], 4
      %s29 = int_to_ptr.vmem [resolvable:$true] %s28
      %34 = dma.hbm_to_vmem [thread:$0]  %s1, 2048, %s29, [#allocation6], 128, 128, 8
    $region9: #{tpu_custom_call.1} parent=1 // pred_fallthru
      _
    // Predicated region
    $region10: #{tpu_custom_call.1} parent=1 // pred_check
      _
    $region11: #{tpu_custom_call.1} parent=1 // pred_check_branch
      %36 = sbr.rel (0) target = $region13
    $region12: #{tpu_custom_call.1} parent=1 // pred_region
      _
    $region13: #{tpu_custom_call.1} parent=1 // pred_fallthru
      _
    // Predicated region
    $region14: #{tpu_custom_call.1} parent=1 // pred_check
      _
    $region15: #{tpu_custom_call.1} parent=1 // pred_check_branch
      %38 = sbr.rel (0) target = $region17
    $region16: #{tpu_custom_call.1} parent=1 // pred_region
      _
    $region17: #{tpu_custom_call.1} parent=1 // pred_fallthru
      _
    // Predicated region
    $region18: #{tpu_custom_call.1} parent=1 // pred_check
      _
    $region19: #{tpu_custom_call.1} parent=1 // pred_check_branch
      %40 = sbr.rel (0) target = $region21
    $region20: #{tpu_custom_call.1} parent=1 // pred_region
      _
    $region21: #{tpu_custom_call.1} parent=1 // pred_fallthru
      _
    // Predicated region
    $region22: #{tpu_custom_call.1} parent=1 // pred_check
      _
    $region23: #{tpu_custom_call.1} parent=1 // pred_check_branch
      %42 = sbr.rel (0) target = $region25
    $region24: #{tpu_custom_call.1} parent=1 // pred_region
      %43 = dma.done [#allocation3], 128
    $region25: #{tpu_custom_call.1} parent=1 // pred_fallthru
      _
    // Predicated region
    $region26: #{tpu_custom_call.1} parent=1 // pred_check
      _
    $region27: #{tpu_custom_call.1} parent=1 // pred_check_branch
      %45 = sbr.rel (0) target = $region29
    $region28: #{tpu_custom_call.1} parent=1 // pred_region
      %46 = dma.done [#allocation6], 2048
    $region29: #{tpu_custom_call.1} parent=1 // pred_fallthru
      _
    %v47 = vld [vmem:[#allocation2] sm:$0xff]
    %v48 = vld [vmem:[#allocation5] sm:$0xff]
    %v49 = vld [vmem:[#allocation5 + $0x8] sm:$0xff]
    %v50 = vld [vmem:[#allocation5 + $0x10] sm:$0xff]
    %v51 = vld [vmem:[#allocation5 + $0x18] sm:$0xff]
    %v52 = vld [vmem:[#allocation5 + $0x20] sm:$0xff]
    %v53 = vld [vmem:[#allocation5 + $0x28] sm:$0xff]
    %v54 = vld [vmem:[#allocation5 + $0x30] sm:$0xff]
    %v55 = vld [vmem:[#allocation5 + $0x38] sm:$0xff]
    %v56 = vld [vmem:[#allocation5 + $0x40] sm:$0xff]
    %v57 = vld [vmem:[#allocation5 + $0x48] sm:$0xff]
    %v58 = vld [vmem:[#allocation5 + $0x50] sm:$0xff]
    %v59 = vld [vmem:[#allocation5 + $0x58] sm:$0xff]
    %v60 = vld [vmem:[#allocation5 + $0x60] sm:$0xff]
    %v61 = vld [vmem:[#allocation5 + $0x68] sm:$0xff]
    %v62 = vld [vmem:[#allocation5 + $0x70] sm:$0xff]
    %v63 = vld [vmem:[#allocation5 + $0x78] sm:$0xff]
    %v64 = vld [vmem:[%s2] sm:$0x1]
    %v66 = vlaneseq
    %v67 = vshrl.u32 %v66, 7
    %v68 = vsub.s32 0, %v67
    %v69 = vrot.slane %v64, %v68
    %71 = vmatprep.subr.mxu0 0.0
    %72 = vmatpush1.msra.mxu0 %v48
    %73 = vmatprep.subr.mxu0 0.0
    %74 = vmatpush1.msra.mxu0 %v49
    %75 = vmatprep.subr.mxu0 0.0
    %76 = vmatpush1.msra.mxu0 %v50
    %77 = vmatprep.subr.mxu0 0.0
    %78 = vmatpush1.msra.mxu0 %v51
    %79 = vmatprep.subr.mxu0 0.0
    %80 = vmatpush1.msra.mxu0 %v52
    %81 = vmatprep.subr.mxu0 0.0
    %82 = vmatpush1.msra.mxu0 %v53
    %83 = vmatprep.subr.mxu0 0.0
    %84 = vmatpush1.msra.mxu0 %v54
    %85 = vmatprep.subr.mxu0 0.0
    %86 = vmatpush1.msra.mxu0 %v55
    %87 = vmatprep.subr.mxu0 0.0
    %88 = vmatpush1.msra.mxu0 %v56
    %89 = vmatprep.subr.mxu0 0.0
    %90 = vmatpush1.msra.mxu0 %v57
    %91 = vmatprep.subr.mxu0 0.0
    %92 = vmatpush1.msra.mxu0 %v58
    %93 = vmatprep.subr.mxu0 0.0
    %94 = vmatpush1.msra.mxu0 %v59
    %95 = vmatprep.subr.mxu0 0.0
    %96 = vmatpush1.msra.mxu0 %v60
    %97 = vmatprep.subr.mxu0 0.0
    %98 = vmatpush1.msra.mxu0 %v61
    %99 = vmatprep.subr.mxu0 0.0
    %100 = vmatpush1.msra.mxu0 %v62
    %101 = vmatprep.subr.mxu0 0.0
    %102 = vmatpush1.msra.mxu0 %v63
    %103 = vmatprep.subr.mxu0 0.0
    %104 = vmatpush1.msra.mxu0 0.0
    %105 = vmatprep.subr.mxu0 0.0
    %106 = vmatpush1.msra.mxu0 0.0
    %107 = vmatprep.subr.mxu0 0.0
    %108 = vmatpush1.msra.mxu0 0.0
    %109 = vmatprep.subr.mxu0 0.0
    %110 = vmatpush1.msra.mxu0 0.0
    %111 = vmatprep.subr.mxu0 0.0
    %112 = vmatpush1.msra.mxu0 0.0
    %113 = vmatprep.subr.mxu0 0.0
    %114 = vmatpush1.msra.mxu0 0.0
    %115 = vmatprep.subr.mxu0 0.0
    %116 = vmatpush1.msra.mxu0 0.0
    %117 = vmatprep.subr.mxu0 0.0
    %118 = vmatpush1.msra.mxu0 0.0
    %119 = vmatprep.subr.mxu0 0.0
    %120 = vmatpush1.msra.mxu0 0.0
    %121 = vmatprep.subr.mxu0 0.0
    %122 = vmatpush1.msra.mxu0 0.0
    %123 = vmatprep.subr.mxu0 0.0
    %124 = vmatpush1.msra.mxu0 0.0
    %125 = vmatprep.subr.mxu0 0.0
    %126 = vmatpush1.msra.mxu0 0.0
    %127 = vmatprep.subr.mxu0 0.0
    %128 = vmatpush1.msra.mxu0 0.0
    %129 = vmatprep.subr.mxu0 0.0
    %130 = vmatpush1.msra.mxu0 0.0
    %131 = vmatprep.subr.mxu0 0.0
    %132 = vmatpush1.msra.mxu0 0.0
    %133 = vmatprep.subr.mxu0 0.0
    %134 = vmatpush1.msra.mxu0 0.0
    %135 = vmatprep.mubr.f32.mxu0 0.0
    %136 = vmatmul.mubr.f32.gmra.mrb[0].mxu0 %v47
    %v137 = vpop.f32.mrb[0].mxu0
    %v138 = vadd.f32 %v69, %v137
    %v139 = vpop.f32.mrb[0].mxu0
    %140 = vdwg.mxu0
    %vm141 = vcmp.ge.f32.partialorder %v138, 0.0
    %v142 = vmul.f32 %v138, 0.01
    %v143 = vsel %vm141, %v138, %v142
    %v144 = vrot.slane %v143, 4
    %v145 = vadd.f32 %v143, %v144
    %v146 = vrot.slane %v145, 2
    %v147 = vadd.f32 %v145, %v146
    %v148 = vrot.slane %v147, 1
    %v149 = vadd.f32 %v147, %v148
    %v150 = vrcp.pop 8.0
    %v151 = vmul.f32 %v149, %v150
    %v152 = vsub.f32 %v143, %v151
    %v153 = vmul.f32 %v152, %v152
    %v154 = vrot.slane %v153, 4
    %v155 = vadd.f32 %v153, %v154
    %v156 = vrot.slane %v155, 2
    %v157 = vadd.f32 %v155, %v156
    %v158 = vrot.slane %v157, 1
    %v159 = vadd.f32 %v157, %v158
    %v160 = vmul.f32 %v159, %v150
    %v161 = vld [vmem:[%s3] sm:$0x1]
    %v162 = vadd.f32 %v160, 1e-05
    %v163 = vrsqrt.pop %v162
    %v164 = vmul.f32 %v161, %v163
    %v165 = vld [vmem:[%s4] sm:$0x1]
    %v166 = vmul.f32 %v151, %v164
    %v167 = vsub.f32 %v165, %v166
    %v169 = vlaneseq
    %v170 = vshrl.u32 %v169, 7
    %v171 = vsub.s32 0, %v170
    %v172 = vrot.slane %v164, %v171
    %v174 = vmul.f32 %v143, %v172
    %v176 = vlaneseq
    %v177 = vshrl.u32 %v176, 7
    %v178 = vsub.s32 0, %v177
    %v179 = vrot.slane %v167, %v178
    %v181 = vadd.f32 %v174, %v179
    %182 = vst [vmem:[#allocation7] sm:$0xff] %v181
    // Predicated region
    $region30: #{tpu_custom_call.1} parent=1 // pred_check
      _
    $region31: #{tpu_custom_call.1} parent=1 // pred_check_branch
      %184 = sbr.rel (0) target = $region33
    $region32: #{tpu_custom_call.1} parent=1 // pred_region
      %s186 = ssub.s32 128, 128
      %187 = vsyncadd [#allocation4], %s186
      %s189 = sshll.u32 [#allocation7], 4
      %s190 = int_to_ptr.vmem [resolvable:$true] %s189
      %192 = dma.vmem_to_hbm [thread:$0]  %s190, 128, %s5, [#allocation4]
    $region33: #{tpu_custom_call.1} parent=1 // pred_fallthru
      _
    // Predicated region
    $region34: #{tpu_custom_call.1} parent=1 // pred_check
      _
    $region35: #{tpu_custom_call.1} parent=1 // pred_check_branch
      %194 = sbr.rel (0) target = $region37
    $region36: #{tpu_custom_call.1} parent=1 // pred_region
      %195 = dma.done [#allocation4], 128
    $region37: #{tpu_custom_call.1} parent=1 // pred_fallthru
      _
    %196 = vsyncpa [#allocation3], 1
    %197 = vsyncpa [#allocation6], 1
    %198 = vsyncpa [#allocation4], 1

</llo_original>
